<compile_context>
chip_gen: v6e
topology: v6e:2x2x1
jax: 0.10.0
libtpu: 0.0.40
codegen_flags: <defaults>
</compile_context>

<pallas_src>
import functools

import jax
import jax.numpy as jnp
import numpy as np
from jax.experimental import pallas as pl
from jax.experimental.pallas import tpu as pltpu


def _round_up(x, m):
    return (x + m - 1) // m * m


def attention_kernel(q_ref, vext_ref, wt_ref, vt_ref, small_ref,
                     ctx_ref, score_ref, m_sc, l_sc, acc_sc,
                     *, t_valid, tanh_bf16):
    # Per grid step (bi, ki):
    #   q_ref     : (Bt, dec_D)        decoder states (mm dtype)
    #   vext_ref  : (Bt, Tt, enc_D+3)  encoder outputs with the 3 conv-window taps
    #                                  concatenated on the K axis (mm dtype)
    #   wt_ref    : (dec_D, Ap)        W.weight.T, zero-padded to Ap lanes
    #   vt_ref    : (enc_D+3, Ap)      [V.weight.T ; conv taps], zero-padded to Ap lanes
    #   small_ref : (2, Ap) f32        row0 = conv_b + b (fc bias cancels in softmax),
    #                                  row1 = fc weight
    #   ctx_ref   : (Bt, enc_D) f32    context (resident across ki, finalized at last ki)
    #   score_ref : (1, Bt, Tt) f32    raw (masked) score tile for this kv step
    #   m_sc/l_sc : (Bt, 1) f32        online-softmax running max / running sum
    #   acc_sc    : (Bt, enc_D) f32    online-softmax context accumulator
    ki = pl.program_id(1)
    nk = pl.num_programs(1)
    Bt, Tt, Kd = vext_ref.shape
    enc_D = ctx_ref.shape[1]
    Ap = vt_ref.shape[1]

    @pl.when(ki == 0)
    def _():
        m_sc[...] = jnp.full(m_sc.shape, -jnp.inf, m_sc.dtype)
        l_sc[...] = jnp.zeros(l_sc.shape, l_sc.dtype)
        acc_sc[...] = jnp.zeros(acc_sc.shape, acc_sc.dtype)

    small = small_ref[...]
    bias = small[0:1, :]                 # (1, Ap): conv bias + b (fc bias dropped)
    fcw = small[1:2, :]                  # (1, Ap): fc weight row

    # Projections on the MXU with big M; the V projection and the location conv share
    # one matmul because the 3 conv taps ride along the K axis of the values tile.
    v_ext = vext_ref[...]                                                    # (Bt, Tt, Kd)
    vv = jnp.dot(v_ext.reshape(Bt * Tt, Kd), vt_ref[...],
                 preferred_element_type=jnp.float32)                         # (Bt*Tt, Ap)
    wq = jnp.dot(q_ref[...], wt_ref[...],
                 preferred_element_type=jnp.float32)                         # (Bt, Ap)

    # score = fc(tanh(W q + V h + conv + bias))   (fc bias cancels in the softmax)
    pre = vv.reshape(Bt, Tt, Ap) + wq[:, None, :] + bias
    if tanh_bf16:  # v6e/v7x only: bf16 EUP tanh; all other math stays f32
        h = jnp.tanh(pre.astype(jnp.bfloat16)).astype(jnp.float32)
    else:
        h = jnp.tanh(pre)
    s = jnp.sum(h * fcw, axis=-1)                                            # (Bt, Tt)

    if t_valid is not None:              # mask encoder-time padding (static condition)
        col = ki * Tt + jax.lax.broadcasted_iota(jnp.int32, (1, Tt), 1)
        s = jnp.where(col < t_valid, s, -1e30)

    # Raw scores stream out lane-dense; the final O(B*T) softmax for the returned
    # attention weights runs in XLA (the kernel consumes the scores online below).
    score_ref[...] = s.reshape(1, Bt, Tt)

    # Flash-style online softmax for the context accumulation.
    m_prev = m_sc[...]
    m_new = jnp.maximum(m_prev, jnp.max(s, axis=-1, keepdims=True))
    alpha = jnp.exp(m_prev - m_new)
    p = jnp.exp(s - m_new)                                                   # (Bt, Tt)
    l_sc[...] = alpha * l_sc[...] + jnp.sum(p, axis=-1, keepdims=True)
    acc_sc[...] = alpha * acc_sc[...] + jnp.sum(
        p[:, :, None] * v_ext[:, :, :enc_D], axis=1)    # only a tile-sized f32 cast is live
    m_sc[...] = m_new

    @pl.when(ki == nk - 1)
    def _():
        li = l_sc[...]
        r = pl.reciprocal(li, approx=True)   # EUP slot
        r = r * (2.0 - li * r)               # one Newton step -> ~full f32 accuracy
        ctx_ref[...] = acc_sc[...] * r


def _plan_tiles(B, T, Kd, enc_D, dec_D, Ap, mm_bytes, budget, block_b):
    """Pick (Bt, Tt, Tp) against a per-generation VMEM budget.

    Footprint model: double-buffered values block + f32 (Bt,Tt,Ap) intermediates
    (vv / pre+tanh / fc product) + resident weights + output blocks.
    """
    sub = 16 if mm_bytes == 2 else 8            # sublane packing of the values tile
    Bp8 = _round_up(B, 8)
    if block_b is not None:
        b_cands = [_round_up(max(int(block_b), 8), 8)]
    else:
        # Keep >= 2 batch blocks when the (padded) batch allows it, so the "parallel"
        # grid axis can feed both v7x TensorCores.
        cap = max(8, ((Bp8 // 2) // 8) * 8) if Bp8 >= 16 else 8
        b_cands = [bt for bt in (32, 16, 8) if bt <= cap] or [8]
    if T <= 256:
        t_cands = [_round_up(T, sub)]
    else:
        t_cands = [t for t in (512, 256, 128) if t <= _round_up(T, 128)] or [128]
    Kd_l = _round_up(Kd, 128)                   # lane-padded K width in VMEM
    for Bt in b_cands:
        for Tt in t_cands:
            vals = 2 * Bt * Tt * Kd_l * mm_bytes              # double-buffered values DMA block
            inter = 3 * Bt * Tt * Ap * 4                      # vv / pre,tanh / h*fcw (f32)
            fixed = (2 * (Kd_l + dec_D) * Ap * mm_bytes       # resident weight blocks
                     + 2 * Bt * Tt * 4                        # score output block (dbuf)
                     + 2 * Bt * enc_D * 4                     # ctx output + acc scratch
                     + 2 * Bt * dec_D * mm_bytes)             # queries block
            if vals + inter + fixed <= budget:
                return Bt, Tt, _round_up(T, Tt)
    Tt = t_cands[-1]
    return 8, Tt, _round_up(T, Tt)


def attention_forward(queries, values, last_attn, params, *, block_b=None,
                      use_bf16=True, tanh_bf16=False):
    """Pallas-backed forward pass.  Returns (context (B,1,enc_D) f32, attn (B,T) f32).

    use_bf16 : bf16 MXU operands / bf16 values DMA (f32 accumulation + f32 softmax math).
               ~2x less HBM traffic on the dominant values stream; loosen tolerances.
    tanh_bf16: run the (Bt,Tt,A) tanh in bf16 (v6e/v7x only; v5e has no bf16 EUP).
    block_b  : override the batch-tile size (multiple of 8); default is auto-sized.
    """
    B, _, dec_D = queries.shape
    _, T, enc_D = values.shape
    A = params["b"].shape[0]
    Ap = _round_up(A, 128)          # lane-pad attn_dim (weights zero-padded)
    Kd = enc_D + 3                  # values + 3 conv-window taps on the K axis

    mm_dtype = jnp.bfloat16 if use_bf16 else jnp.float32
    mm_bytes = 2 if use_bf16 else 4

    # ---- generation-aware VMEM budget (v5e/v6e: 128 MiB, v7x: 64 MiB per TC) ----
    try:
        vmem_cap = int(pltpu.get_tpu_info().vmem_capacity_bytes)
    except Exception:
        vmem_cap = 64 * 1024 * 1024          # conservative fallback (v7x per-core)
    vmem_limit = max(32 << 20, min(int(vmem_cap * 0.8), 100 << 20))
    Bt, Tt, Tp = _plan_tiles(B, T, Kd, enc_D, dec_D, Ap, mm_bytes,
                             int(vmem_cap * 0.6), block_b)
    Bp = _round_up(B, Bt)
    nb, nT = Bp // Bt, Tp // Tt

    # ---- wrapper-side layout plumbing (pure XLA, outside the hot loop) ----
    q2 = queries.reshape(B, dec_D)
    v3 = values
    a = last_attn.astype(jnp.float32)
    if Bp != B:
        q2 = jnp.pad(q2, ((0, Bp - B), (0, 0)))
        v3 = jnp.pad(v3, ((0, Bp - B), (0, 0), (0, 0)))
        a = jnp.pad(a, ((0, Bp - B), (0, 0)))
    if Tp != T:
        v3 = jnp.pad(v3, ((0, 0), (0, Tp - T), (0, 0)))
        a = jnp.pad(a, ((0, 0), (0, Tp - T)))

    # Conv1d(in=1, out=A, k=3, pad=1) windows: a_shift[b, t, k] = a_pad[b, t + k].
    a_pad = jnp.pad(a, ((0, 0), (1, 1)))
    a_shift = jnp.stack([a_pad[:, 0:Tp], a_pad[:, 1:Tp + 1], a_pad[:, 2:Tp + 2]], axis=-1)

    # Fold the conv into the V projection: the 3 taps ride the lane-dense values DMA,
    # so there is no (Bt, T, 3) buffer / descriptor-bound DMA / in-kernel relayout.
    v_ext = jnp.concatenate([v3.astype(jnp.float32), a_shift], axis=-1).astype(mm_dtype)
    q2 = q2.astype(mm_dtype)

    def pad_a(x):  # zero-pad the attn-dim (last axis) up to Ap
        return jnp.pad(x, ((0, 0), (0, Ap - A)))

    wt = pad_a(params["W_w"].T).astype(mm_dtype)                              # (dec_D, Ap)
    taps = jnp.transpose(params["conv_w"][:, 0, :])                            # (3, A) [tap, ch]
    vt_ext = pad_a(jnp.concatenate([params["V_w"].T, taps], axis=0)).astype(mm_dtype)  # (Kd, Ap)
    bias = (params["conv_b"] + params["b"]).reshape(1, A)    # fc bias cancels in the softmax
    fcw = params["fc_w"].reshape(1, A)
    small = pad_a(jnp.concatenate([bias, fcw], axis=0)).astype(jnp.float32)    # (2, Ap)

    kernel = functools.partial(attention_kernel,
                               t_valid=(T if Tp != T else None),
                               tanh_bf16=tanh_bf16)

    ctx, score = pl.pallas_call(
        kernel,
        grid_spec=pltpu.PrefetchScalarGridSpec(
            num_scalar_prefetch=0,
            grid=(nb, nT),
            in_specs=[
                pl.BlockSpec((Bt, dec_D), lambda bi, ki: (bi, 0)),        # queries
                pl.BlockSpec((Bt, Tt, Kd), lambda bi, ki: (bi, ki, 0)),   # values ++ conv taps
                pl.BlockSpec((dec_D, Ap), lambda bi, ki: (0, 0)),         # W.T (resident)
                pl.BlockSpec((Kd, Ap), lambda bi, ki: (0, 0)),            # [V.T ; taps] (resident)
                pl.BlockSpec((2, Ap), lambda bi, ki: (0, 0)),             # folded bias + fc row
            ],
            out_specs=(
                pl.BlockSpec((Bt, enc_D), lambda bi, ki: (bi, 0)),        # context (resident over ki)
                pl.BlockSpec((1, Bt, Tt), lambda bi, ki: (ki, bi, 0)),    # raw score tiles
            ),
            scratch_shapes=[
                pltpu.VMEM((Bt, 1), jnp.float32),        # running max
                pltpu.VMEM((Bt, 1), jnp.float32),        # running sum
                pltpu.VMEM((Bt, enc_D), jnp.float32),    # context accumulator
            ],
        ),
        out_shape=(jax.ShapeDtypeStruct((Bp, enc_D), jnp.float32),
                   jax.ShapeDtypeStruct((nT, Bp, Tt), jnp.float32)),
        compiler_params=pltpu.CompilerParams(
            dimension_semantics=("parallel", "arbitrary"),
            vmem_limit_bytes=vmem_limit,
        ),
    )(q2, v_ext, wt, vt_ext, small)

    # Final normalization of the returned attention weights: O(B*T) elementwise in XLA
    # (negligible next to the kernel; the kernel already consumed the scores online).
    score = jnp.transpose(score, (1, 0, 2)).reshape(Bp, Tp)[:B, :T]
    attn = jax.nn.softmax(score, axis=-1)
    return ctx[:B].reshape(B, 1, enc_D), attn


def attention_reference(queries, values, last_attn, params):
    """Pure-JAX reference matching the PyTorch forward (smoothing=False, mask=None)."""
    B, T = last_attn.shape
    a_pad = jnp.pad(last_attn, ((0, 0), (1, 1)))
    a_shift = jnp.stack([a_pad[:, 0:T], a_pad[:, 1:T + 1], a_pad[:, 2:T + 2]], axis=-1)
    conv_attn = jnp.einsum("btk,ck->btc", a_shift, params["conv_w"][:, 0, :]) + params["conv_b"]
    wq = queries @ params["W_w"].T                       # (B, 1, A)
    vv = values @ params["V_w"].T                        # (B, T, A)
    h = jnp.tanh(wq + vv + conv_attn + params["b"])
    score = (h @ params["fc_w"].T + params["fc_b"])[..., 0]    # (B, T)
    attn = jax.nn.softmax(score, axis=-1)
    ctx = jnp.einsum("bt,btd->bd", attn, values)[:, None, :]
    return ctx, attn


if __name__ == "__main__":
    def make_params(key, dec_dim, enc_dim, attn_dim):
        ks = jax.random.split(key, 7)
        return {
            "conv_w": jax.random.normal(ks[0], (attn_dim, 1, 3), jnp.float32) * 0.2,
            "conv_b": jax.random.normal(ks[1], (attn_dim,), jnp.float32) * 0.1,
            "W_w": jax.random.normal(ks[2], (attn_dim, dec_dim), jnp.float32) * 0.2,
            "V_w": jax.random.normal(ks[3], (attn_dim, enc_dim), jnp.float32) * 0.2,
            "fc_w": jax.random.normal(ks[4], (1, attn_dim), jnp.float32) * 0.2,
            "fc_b": jax.random.normal(ks[5], (1,), jnp.float32) * 0.1,
            "b": jax.random.normal(ks[6], (attn_dim,), jnp.float32) * 0.1,
        }

    keys = jax.random.split(jax.random.PRNGKey(0), 8)

    # ---- case 1: small shapes implied by the module (B=2, dec=16, enc=32, A=32, T=8) ----
    B, dec_dim, enc_dim, attn_dim, enc_T = 2, 16, 32, 32, 8
    params = make_params(keys[0], dec_dim, enc_dim, attn_dim)
    queries = jax.random.normal(keys[1], (B, 1, dec_dim), jnp.float32)
    values = jax.random.normal(keys[2], (B, enc_T, enc_dim), jnp.float32)
    last_attn = jax.nn.softmax(jax.random.normal(keys[3], (B, enc_T), jnp.float32), axis=-1)

    ctx_exp, attn_exp = attention_reference(queries, values, last_attn, params)

    # Exact-operand path (f32 MXU operands): tight check.
    ctx, attn = attention_forward(queries, values, last_attn, params, use_bf16=False)
    jax.block_until_ready((ctx, attn))
    np.testing.assert_allclose(np.asarray(ctx), np.asarray(ctx_exp), rtol=1e-4, atol=1e-4)
    np.testing.assert_allclose(np.asarray(attn), np.asarray(attn_exp), rtol=1e-4, atol=1e-4)

    # Default fast path (bf16 MXU operands / values DMA, f32 accumulation): loose check.
    ctx, attn = attention_forward(queries, values, last_attn, params)
    jax.block_until_ready((ctx, attn))
    np.testing.assert_allclose(np.asarray(ctx), np.asarray(ctx_exp), rtol=5e-2, atol=5e-2)
    np.testing.assert_allclose(np.asarray(attn), np.asarray(attn_exp), rtol=5e-2, atol=5e-2)

    # ---- case 2: exercises batch tiling, encoder-time tiling (online softmax) + padding ----
    B2, dec2, enc2, attn2_d, T2 = 20, 16, 32, 48, 384
    params2 = make_params(keys[4], dec2, enc2, attn2_d)
    queries2 = jax.random.normal(keys[5], (B2, 1, dec2), jnp.float32)
    values2 = jax.random.normal(keys[6], (B2, T2, enc2), jnp.float32)
    last_attn2 = jax.nn.softmax(jax.random.normal(keys[7], (B2, T2), jnp.float32), axis=-1)

    ctx2_exp, attn2_exp = attention_reference(queries2, values2, last_attn2, params2)
    ctx2, attn2 = attention_forward(queries2, values2, last_attn2, params2, use_bf16=False)
    jax.block_until_ready((ctx2, attn2))
    np.testing.assert_allclose(np.asarray(ctx2), np.asarray(ctx2_exp), rtol=2e-4, atol=2e-4)
    np.testing.assert_allclose(np.asarray(attn2), np.asarray(attn2_exp), rtol=2e-4, atol=2e-4)

    print("KERNEL_OK")
</pallas_src>

<mosaic_0001>
module attributes {stable_mosaic.version = 11 : i64} {
  func.func @attention_kernel(%arg0: i32, %arg1: i32, %arg2: memref<8x16xf32, #tpu.memory_space<vmem>>, %arg3: memref<8x8x35xf32, #tpu.memory_space<vmem>>, %arg4: memref<16x128xf32, #tpu.memory_space<vmem>>, %arg5: memref<35x128xf32, #tpu.memory_space<vmem>>, %arg6: memref<2x128xf32, #tpu.memory_space<vmem>>, %arg7: memref<8x32xf32, #tpu.memory_space<vmem>>, %arg8: memref<1x8x8xf32, #tpu.memory_space<vmem>>, %arg9: memref<8x1xf32, #tpu.memory_space<vmem>>, %arg10: memref<8x1xf32, #tpu.memory_space<vmem>>, %arg11: memref<8x32xf32, #tpu.memory_space<vmem>>) attributes {dimension_semantics = [#tpu.dimension_semantics<parallel>, #tpu.dimension_semantics<arbitrary>], iteration_bounds = array<i64: 1, 1>, scalar_prefetch = 0 : i64, scratch_operands = 3 : i64, tpu.core_type = #tpu.core_type<tc>, window_params = [{transform_indices = @transform_0, window_bounds = array<i64: 8, 16>}, {transform_indices = @transform_1, window_bounds = array<i64: 8, 8, 35>}, {pipeline_mode = #tpu.pipeline_mode<synchronous>, transform_indices = @transform_2, window_bounds = array<i64: 16, 128>}, {pipeline_mode = #tpu.pipeline_mode<synchronous>, transform_indices = @transform_3, window_bounds = array<i64: 35, 128>}, {pipeline_mode = #tpu.pipeline_mode<synchronous>, transform_indices = @transform_4, window_bounds = array<i64: 2, 128>}, {transform_indices = @transform_5, window_bounds = array<i64: 8, 32>}, {transform_indices = @transform_6, window_bounds = array<i64: 1, 8, 8>}]} {
    %c0_i32 = arith.constant 0 : i32
    %0 = arith.cmpi eq, %arg1, %c0_i32 : i32
    %1 = arith.extui %0 : i1 to i32
    %c0_i32_0 = arith.constant 0 : i32
    %2 = arith.cmpi ne, %1, %c0_i32_0 : i32
    scf.if %2 {
      %cst_33 = arith.constant 0xFF800000 : f32
      %56 = vector.broadcast %cst_33 : f32 to vector<8x1xf32>
      %c0_34 = arith.constant 0 : index
      %c0_35 = arith.constant 0 : index
      %57 = vector.load %arg9[%c0_34, %c0_35] : memref<8x1xf32, #tpu.memory_space<vmem>>, vector<8x1xf32>
      tpu.vector_store %arg9[%c0_34, %c0_35], %56 {strides = array<i32>} : memref<8x1xf32, #tpu.memory_space<vmem>>, vector<8x1xf32>,
      %cst_36 = arith.constant 0.000000e+00 : f32
      %58 = vector.broadcast %cst_36 : f32 to vector<8x1xf32>
      %c0_37 = arith.constant 0 : index
      %c0_38 = arith.constant 0 : index
      %59 = vector.load %arg10[%c0_37, %c0_38] : memref<8x1xf32, #tpu.memory_space<vmem>>, vector<8x1xf32>
      tpu.vector_store %arg10[%c0_37, %c0_38], %58 {strides = array<i32>} : memref<8x1xf32, #tpu.memory_space<vmem>>, vector<8x1xf32>,
      %cst_39 = arith.constant 0.000000e+00 : f32
      %60 = vector.broadcast %cst_39 : f32 to vector<8x32xf32>
      %c0_40 = arith.constant 0 : index
      %c0_41 = arith.constant 0 : index
      %61 = vector.load %arg11[%c0_40, %c0_41] : memref<8x32xf32, #tpu.memory_space<vmem>>, vector<8x32xf32>
      tpu.vector_store %arg11[%c0_40, %c0_41], %60 {strides = array<i32>} : memref<8x32xf32, #tpu.memory_space<vmem>>, vector<8x32xf32>,
    } else {
    }
    %c0 = arith.constant 0 : index
    %c0_1 = arith.constant 0 : index
    %3 = vector.load %arg6[%c0, %c0_1] : memref<2x128xf32, #tpu.memory_space<vmem>>, vector<2x128xf32>
    %4 = vector.extract_strided_slice %3 {offsets = [0, 0], sizes = [1, 128], strides = [1, 1]} : vector<2x128xf32> to vector<1x128xf32>
    %5 = vector.extract_strided_slice %3 {offsets = [1, 0], sizes = [1, 128], strides = [1, 1]} : vector<2x128xf32> to vector<1x128xf32>
    %c0_2 = arith.constant 0 : index
    %c0_3 = arith.constant 0 : index
    %c0_4 = arith.constant 0 : index
    %6 = vector.load %arg3[%c0_2, %c0_3, %c0_4] : memref<8x8x35xf32, #tpu.memory_space<vmem>>, vector<8x8x35xf32>
    %7 = vector.shape_cast %6 : vector<8x8x35xf32> to vector<64x35xf32>
    %c0_5 = arith.constant 0 : index
    %c0_6 = arith.constant 0 : index
    %8 = vector.load %arg5[%c0_5, %c0_6] : memref<35x128xf32, #tpu.memory_space<vmem>>, vector<35x128xf32>
    %cst = arith.constant dense<0.000000e+00> : vector<64x128xf32>
    %9 = tpu.matmul %7, %8, %cst {dimension_numbers = #tpu.dot_dimension_numbers<[1], [0], [0], [1], [0, 0, 1, 1], [], []>} : vector<64x35xf32>, vector<35x128xf32>, vector<64x128xf32> -> vector<64x128xf32>
    %c0_7 = arith.constant 0 : index
    %c0_8 = arith.constant 0 : index
    %10 = vector.load %arg2[%c0_7, %c0_8] : memref<8x16xf32, #tpu.memory_space<vmem>>, vector<8x16xf32>
    %c0_9 = arith.constant 0 : index
    %c0_10 = arith.constant 0 : index
    %11 = vector.load %arg4[%c0_9, %c0_10] : memref<16x128xf32, #tpu.memory_space<vmem>>, vector<16x128xf32>
    %cst_11 = arith.constant dense<0.000000e+00> : vector<8x128xf32>
    %12 = tpu.matmul %10, %11, %cst_11 {dimension_numbers = #tpu.dot_dimension_numbers<[1], [0], [0], [1], [0, 0, 1, 1], [], []>} : vector<8x16xf32>, vector<16x128xf32>, vector<8x128xf32> -> vector<8x128xf32>
    %13 = vector.shape_cast %9 : vector<64x128xf32> to vector<8x8x128xf32>
    %14 = vector.shape_cast %12 : vector<8x128xf32> to vector<8x1x128xf32>
    %15 = vector.broadcast %14 : vector<8x1x128xf32> to vector<8x8x128xf32>
    %16 = arith.addf %13, %15 : vector<8x8x128xf32>
    %17 = vector.shape_cast %4 : vector<1x128xf32> to vector<1x1x128xf32>
    %18 = vector.broadcast %17 : vector<1x1x128xf32> to vector<8x8x128xf32>
    %19 = arith.addf %16, %18 : vector<8x8x128xf32>
    %20 = math.tanh %19 : vector<8x8x128xf32>
    %21 = vector.shape_cast %5 : vector<1x128xf32> to vector<1x1x128xf32>
    %22 = vector.broadcast %21 : vector<1x1x128xf32> to vector<8x8x128xf32>
    %23 = arith.mulf %20, %22 : vector<8x8x128xf32>
    %cst_12 = arith.constant dense<0.000000e+00> : vector<8x8xf32>
    %24 = vector.multi_reduction <add>, %23, %cst_12 [2] : vector<8x8x128xf32> to vector<8x8xf32>
    %25 = vector.shape_cast %24 : vector<8x8xf32> to vector<1x8x8xf32>
    %c0_13 = arith.constant 0 : index
    %c0_14 = arith.constant 0 : index
    %c0_15 = arith.constant 0 : index
    %26 = vector.load %arg8[%c0_13, %c0_14, %c0_15] : memref<1x8x8xf32, #tpu.memory_space<vmem>>, vector<1x8x8xf32>
    tpu.vector_store %arg8[%c0_13, %c0_14, %c0_15], %25 {strides = array<i32>} : memref<1x8x8xf32, #tpu.memory_space<vmem>>, vector<1x8x8xf32>,
    %c0_16 = arith.constant 0 : index
    %c0_17 = arith.constant 0 : index
    %27 = vector.load %arg9[%c0_16, %c0_17] : memref<8x1xf32, #tpu.memory_space<vmem>>, vector<8x1xf32>
    %cst_18 = arith.constant dense<0xFF800000> : vector<8xf32>
    %28 = vector.multi_reduction <maximumf>, %24, %cst_18 [1] : vector<8x8xf32> to vector<8xf32>
    %29 = vector.shape_cast %28 : vector<8xf32> to vector<8x1xf32>
    %30 = arith.maximumf %27, %29 : vector<8x1xf32>
    %31 = arith.subf %27, %30 : vector<8x1xf32>
    %32 = math.exp %31 : vector<8x1xf32>
    %33 = vector.broadcast %30 : vector<8x1xf32> to vector<8x8xf32>
    %34 = arith.subf %24, %33 : vector<8x8xf32>
    %35 = math.exp %34 : vector<8x8xf32>
    %c0_19 = arith.constant 0 : index
    %c0_20 = arith.constant 0 : index
    %36 = vector.load %arg10[%c0_19, %c0_20] : memref<8x1xf32, #tpu.memory_space<vmem>>, vector<8x1xf32>
    %37 = arith.mulf %32, %36 : vector<8x1xf32>
    %cst_21 = arith.constant dense<0.000000e+00> : vector<8xf32>
    %38 = vector.multi_reduction <add>, %35, %cst_21 [1] : vector<8x8xf32> to vector<8xf32>
    %39 = vector.shape_cast %38 : vector<8xf32> to vector<8x1xf32>
    %40 = arith.addf %37, %39 : vector<8x1xf32>
    %c0_22 = arith.constant 0 : index
    %c0_23 = arith.constant 0 : index
    %41 = vector.load %arg10[%c0_22, %c0_23] : memref<8x1xf32, #tpu.memory_space<vmem>>, vector<8x1xf32>
    tpu.vector_store %arg10[%c0_22, %c0_23], %40 {strides = array<i32>} : memref<8x1xf32, #tpu.memory_space<vmem>>, vector<8x1xf32>,
    %c0_24 = arith.constant 0 : index
    %c0_25 = arith.constant 0 : index
    %42 = vector.load %arg11[%c0_24, %c0_25] : memref<8x32xf32, #tpu.memory_space<vmem>>, vector<8x32xf32>
    %43 = vector.broadcast %32 : vector<8x1xf32> to vector<8x32xf32>
    %44 = arith.mulf %43, %42 : vector<8x32xf32>
    %45 = vector.shape_cast %35 : vector<8x8xf32> to vector<8x8x1xf32>
    %46 = vector.extract_strided_slice %6 {offsets = [0, 0, 0], sizes = [8, 8, 32], strides = [1, 1, 1]} : vector<8x8x35xf32> to vector<8x8x32xf32>
    %47 = vector.broadcast %45 : vector<8x8x1xf32> to vector<8x8x32xf32>
    %48 = arith.mulf %47, %46 : vector<8x8x32xf32>
    %cst_26 = arith.constant dense<0.000000e+00> : vector<8x32xf32>
    %49 = vector.multi_reduction <add>, %48, %cst_26 [1] : vector<8x8x32xf32> to vector<8x32xf32>
    %50 = arith.addf %44, %49 : vector<8x32xf32>
    %c0_27 = arith.constant 0 : index
    %c0_28 = arith.constant 0 : index
    %51 = vector.load %arg11[%c0_27, %c0_28] : memref<8x32xf32, #tpu.memory_space<vmem>>, vector<8x32xf32>
    tpu.vector_store %arg11[%c0_27, %c0_28], %50 {strides = array<i32>} : memref<8x32xf32, #tpu.memory_space<vmem>>, vector<8x32xf32>,
    %c0_29 = arith.constant 0 : index
    %c0_30 = arith.constant 0 : index
    %52 = vector.load %arg9[%c0_29, %c0_30] : memref<8x1xf32, #tpu.memory_space<vmem>>, vector<8x1xf32>
    tpu.vector_store %arg9[%c0_29, %c0_30], %30 {strides = array<i32>} : memref<8x1xf32, #tpu.memory_space<vmem>>, vector<8x1xf32>,
    %c0_i32_31 = arith.constant 0 : i32
    %53 = arith.cmpi eq, %arg1, %c0_i32_31 : i32
    %54 = arith.extui %53 : i1 to i32
    %c0_i32_32 = arith.constant 0 : i32
    %55 = arith.cmpi ne, %54, %c0_i32_32 : i32
    scf.if %55 {
      %c0_33 = arith.constant 0 : index
      %c0_34 = arith.constant 0 : index
      %56 = vector.load %arg10[%c0_33, %c0_34] : memref<8x1xf32, #tpu.memory_space<vmem>>, vector<8x1xf32>
      %57 = tpu.reciprocal %56 {approx = true} : vector<8x1xf32> -> vector<8x1xf32>
      %58 = arith.mulf %56, %57 : vector<8x1xf32>
      %cst_35 = arith.constant 2.000000e+00 : f32
      %59 = vector.broadcast %cst_35 : f32 to vector<8x1xf32>
      %60 = arith.subf %59, %58 : vector<8x1xf32>
      %61 = arith.mulf %57, %60 : vector<8x1xf32>
      %c0_36 = arith.constant 0 : index
      %c0_37 = arith.constant 0 : index
      %62 = vector.load %arg11[%c0_36, %c0_37] : memref<8x32xf32, #tpu.memory_space<vmem>>, vector<8x32xf32>
      %63 = vector.broadcast %61 : vector<8x1xf32> to vector<8x32xf32>
      %64 = arith.mulf %62, %63 : vector<8x32xf32>
      %c0_38 = arith.constant 0 : index
      %c0_39 = arith.constant 0 : index
      %65 = vector.load %arg7[%c0_38, %c0_39] : memref<8x32xf32, #tpu.memory_space<vmem>>, vector<8x32xf32>
      tpu.vector_store %arg7[%c0_38, %c0_39], %64 {strides = array<i32>} : memref<8x32xf32, #tpu.memory_space<vmem>>, vector<8x32xf32>,
    } else {
    }
    return
  }
  func.func @transform_0(%arg0: i32, %arg1: i32) -> (i32, i32) {
    %c0_i32 = arith.constant 0 : i32
    %c0_i32_0 = arith.constant 0 : i32
    return %arg0, %c0_i32 : i32, i32
  }
  func.func @transform_1(%arg0: i32, %arg1: i32) -> (i32, i32, i32) {
    %c0_i32 = arith.constant 0 : i32
    %c0_i32_0 = arith.constant 0 : i32
    return %arg0, %arg1, %c0_i32 : i32, i32, i32
  }
  func.func @transform_2(%arg0: i32, %arg1: i32) -> (i32, i32) {
    %c0_i32 = arith.constant 0 : i32
    %c0_i32_0 = arith.constant 0 : i32
    %c0_i32_1 = arith.constant 0 : i32
    return %c0_i32, %c0_i32_0 : i32, i32
  }
  func.func @transform_3(%arg0: i32, %arg1: i32) -> (i32, i32) {
    %c0_i32 = arith.constant 0 : i32
    %c0_i32_0 = arith.constant 0 : i32
    %c0_i32_1 = arith.constant 0 : i32
    return %c0_i32, %c0_i32_0 : i32, i32
  }
  func.func @transform_4(%arg0: i32, %arg1: i32) -> (i32, i32) {
    %c0_i32 = arith.constant 0 : i32
    %c0_i32_0 = arith.constant 0 : i32
    %c0_i32_1 = arith.constant 0 : i32
    return %c0_i32, %c0_i32_0 : i32, i32
  }
  func.func @transform_5(%arg0: i32, %arg1: i32) -> (i32, i32) {
    %c0_i32 = arith.constant 0 : i32
    %c0_i32_0 = arith.constant 0 : i32
    return %arg0, %c0_i32 : i32, i32
  }
  func.func @transform_6(%arg0: i32, %arg1: i32) -> (i32, i32, i32) {
    %c0_i32 = arith.constant 0 : i32
    %c0_i32_0 = arith.constant 0 : i32
    return %arg1, %arg0, %c0_i32 : i32, i32, i32
  }
}

</mosaic_0001>

<llo_original>
// kernel: tpu_custom_call.1
$region0: #{tpu_custom_call.1}
  #allocation0 [shape = 'u32[]', space=smem, size = 0x4, offset = 0x4, fixed_abs, tag = 'smem constant byte address 0x4 - core index']
  #allocation1 [shape = 'u32[144,128]{1,0:T(1,128)}', space=vmem, size = 0x12000, scoped, tag = 'internal scratch']
  #allocation2 [shape = 'f32[8,1]{1,0:T(8,128)}', space=vmem, size = 0x1000, scoped, tag = 'scratch operand']
  #allocation3 [shape = 'f32[8,1]{1,0:T(8,128)}', space=vmem, size = 0x1000, scoped, tag = 'scratch operand']
  #allocation4 [shape = 'f32[8,32]{1,0:T(8,128)}', space=vmem, size = 0x1000, scoped, tag = 'scratch operand']
  %s0 = inlined_call_operand.hbm [shape: f32[8,16], index: 0, kind: input, shape index: {}]
  %s1 = inlined_call_operand.hbm [shape: f32[8,8,35], index: 1, kind: input, shape index: {}]
  %s2 = inlined_call_operand.hbm [shape: f32[16,128], index: 2, kind: input, shape index: {}]
  %s3 = inlined_call_operand.hbm [shape: f32[35,128], index: 3, kind: input, shape index: {}]
  %s4 = inlined_call_operand.vmem [shape: f32[2,128], index: 4, kind: input, shape index: {}]
  %s5 = inlined_call_operand.hbm [shape: f32[8,32], index: 5, kind: output, shape index: {0}]
  %s6 = inlined_call_operand.hbm [shape: f32[1,8,8], index: 6, kind: output, shape index: {1}]
  %7 = xla_tuple %s5, %s6
  %s8 = sld [smem:[#allocation0]]
  $region62: #{tpu_custom_call.1} parent=0
    _
  %s10 = ssub.s32 1, %s8
  %s11 = scalar_select 0, %s10, %s8
  $region1: #{tpu_custom_call.1} parent=0
    #allocation5 [shape = 'u8[4096]{0}', space=vmem, size = 0x1000, scoped, tag = 'input window, operand 0, single buffered']
    #allocation6 [shape = 's32[1]{0}', space=sflag, size = 0x4, scoped, tag = 'scoped memory for tpu_custom_call.1']
    #allocation7 [shape = 's32[1]{0}', space=sflag, size = 0x4, scoped, tag = 'scoped memory for tpu_custom_call.1']
    #allocation8 [shape = 'u8[32768]{0}', space=vmem, size = 0x8000, scoped, tag = 'input window, operand 1, single buffered']
    #allocation9 [shape = 's32[1]{0}', space=sflag, size = 0x4, scoped, tag = 'scoped memory for tpu_custom_call.1']
    #allocation10 [shape = 'u8[8192]{0}', space=vmem, size = 0x2000, scoped, tag = 'input window, operand 2, single buffered']
    #allocation11 [shape = 'u8[20480]{0}', space=vmem, size = 0x5000, scoped, tag = 'input window, operand 3, single buffered']
    #allocation12 [shape = 's32[1]{0}', space=sflag, size = 0x4, scoped, tag = 'scoped memory for tpu_custom_call.1']
    #allocation13 [shape = 'u8[4096]{0}', space=vmem, size = 0x1000, scoped, tag = 'output window, operand 0, single buffered']
    #allocation14 [shape = 'u8[4096]{0}', space=vmem, size = 0x1000, scoped, tag = 'output window, operand 1, single buffered']
    #allocation15 [shape = 's32[1]{0}', space=sflag, size = 0x4, scoped, tag = 'scoped memory for tpu_custom_call.1']
    %12 = vsyncpa [#allocation6], 0
    %13 = vsyncpa [#allocation9], 0
    %14 = vsyncpa [#allocation12], 0
    %15 = vsyncpa [#allocation7], 0
    %16 = vsyncpa [#allocation15], 0
    // Predicated region
    $region2: #{tpu_custom_call.1} parent=1 // pred_check
      _
    $region3: #{tpu_custom_call.1} parent=1 // pred_check_branch
      %18 = sbr.rel (0) target = $region5
    $region4: #{tpu_custom_call.1} parent=1 // pred_region
      %s20 = ssub.s32 128, 128
      %21 = vsyncadd [#allocation6], %s20
      %s23 = sshll.u32 [#allocation5], 4
      %s24 = int_to_ptr.vmem [resolvable:$true] %s23
      %26 = dma.hbm_to_vmem [thread:$0]  %s0, 128, %s24, [#allocation6]
    $region5: #{tpu_custom_call.1} parent=1 // pred_fallthru
      _
    // Predicated region
    $region6: #{tpu_custom_call.1} parent=1 // pred_check
      _
    $region7: #{tpu_custom_call.1} parent=1 // pred_check_branch
      %28 = sbr.rel (0) target = $region9
    $region8: #{tpu_custom_call.1} parent=1 // pred_region
      %s30 = ssub.s32 1024, 1024
      %31 = vsyncadd [#allocation9], %s30
      %s32 = sshll.u32 [#allocation8], 4
      %s33 = int_to_ptr.vmem [resolvable:$true] %s32
      %38 = dma.hbm_to_vmem [thread:$0]  %s1, 1024, %s33, [#allocation9], 128, 128, 8
    $region9: #{tpu_custom_call.1} parent=1 // pred_fallthru
      _
    // Predicated region
    $region10: #{tpu_custom_call.1} parent=1 // pred_check
      _
    $region11: #{tpu_custom_call.1} parent=1 // pred_check_branch
      %40 = sbr.rel (0) target = $region13
    $region12: #{tpu_custom_call.1} parent=1 // pred_region
      %s42 = ssub.s32 256, 256
      %43 = vsyncadd [#allocation9], %s42
      %s44 = sshll.u32 [#allocation10], 4
      %s45 = int_to_ptr.vmem [resolvable:$true] %s44
      %50 = dma.hbm_to_vmem [thread:$0]  %s2, 256, %s45, [#allocation9], 128, 128, 8
    $region13: #{tpu_custom_call.1} parent=1 // pred_fallthru
      _
    // Predicated region
    $region14: #{tpu_custom_call.1} parent=1 // pred_check
      _
    $region15: #{tpu_custom_call.1} parent=1 // pred_check_branch
      %52 = sbr.rel (0) target = $region17
    $region16: #{tpu_custom_call.1} parent=1 // pred_region
      %s54 = ssub.s32 640, 640
      %55 = vsyncadd [#allocation12], %s54
      %s56 = sshll.u32 [#allocation11], 4
      %s57 = int_to_ptr.vmem [resolvable:$true] %s56
      %62 = dma.hbm_to_vmem [thread:$0]  %s3, 640, %s57, [#allocation12], 128, 128, 8
    $region17: #{tpu_custom_call.1} parent=1 // pred_fallthru
      _
    // Predicated region
    $region18: #{tpu_custom_call.1} parent=1 // pred_check
      _
    $region19: #{tpu_custom_call.1} parent=1 // pred_check_branch
      %64 = sbr.rel (0) target = $region21
    $region20: #{tpu_custom_call.1} parent=1 // pred_region
      _
    $region21: #{tpu_custom_call.1} parent=1 // pred_fallthru
      _
    // Predicated region
    $region22: #{tpu_custom_call.1} parent=1 // pred_check
      _
    $region23: #{tpu_custom_call.1} parent=1 // pred_check_branch
      %66 = sbr.rel (0) target = $region25
    $region24: #{tpu_custom_call.1} parent=1 // pred_region
      %67 = dma.done [#allocation6], 128
    $region25: #{tpu_custom_call.1} parent=1 // pred_fallthru
      _
    // Predicated region
    $region26: #{tpu_custom_call.1} parent=1 // pred_check
      _
    $region27: #{tpu_custom_call.1} parent=1 // pred_check_branch
      %69 = sbr.rel (0) target = $region29
    $region28: #{tpu_custom_call.1} parent=1 // pred_region
      %70 = dma.done [#allocation9], 1024
    $region29: #{tpu_custom_call.1} parent=1 // pred_fallthru
      _
    // Predicated region
    $region30: #{tpu_custom_call.1} parent=1 // pred_check
      _
    $region31: #{tpu_custom_call.1} parent=1 // pred_check_branch
      %72 = sbr.rel (0) target = $region33
    $region32: #{tpu_custom_call.1} parent=1 // pred_region
      %73 = dma.done [#allocation9], 256
    $region33: #{tpu_custom_call.1} parent=1 // pred_fallthru
      _
    // Predicated region
    $region34: #{tpu_custom_call.1} parent=1 // pred_check
      _
    $region35: #{tpu_custom_call.1} parent=1 // pred_check_branch
      %75 = sbr.rel (0) target = $region37
    $region36: #{tpu_custom_call.1} parent=1 // pred_region
      %76 = dma.done [#allocation12], 640
    $region37: #{tpu_custom_call.1} parent=1 // pred_fallthru
      _
    %p77 = scmp.eq.s32.totalorder 0, 0
    // Predicated region
    $region38: #{tpu_custom_call.1} parent=1 // pred_check
      %p78 = pneg %p77
    $region39: #{tpu_custom_call.1} parent=1 // pred_check_branch
      %80 = sbr.rel (%p78) target = $region41
    $region40: #{tpu_custom_call.1} parent=1 // pred_region
      %vm81 = vcmask 7168
      %82 = vst.msk [vmem:[#allocation2] sm:$0xff] %vm81, -inf
      %83 = vst.msk [vmem:[#allocation3] sm:$0xff] %vm81, 0.0
      %vm84 = vcmask 261120
      %85 = vst.msk [vmem:[#allocation4] sm:$0xff] %vm84, 0.0
    $region41: #{tpu_custom_call.1} parent=1 // pred_fallthru
      _
    %v86 = vld [vmem:[%s4] sm:$0x3]
    %v87 = vld [vmem:[#allocation8] sm:$0xff]
    %v88 = vld [vmem:[#allocation8 + $0x8] sm:$0xff]
    %v89 = vld [vmem:[#allocation8 + $0x10] sm:$0xff]
    %v90 = vld [vmem:[#allocation8 + $0x18] sm:$0xff]
    %v91 = vld [vmem:[#allocation8 + $0x20] sm:$0xff]
    %v92 = vld [vmem:[#allocation8 + $0x28] sm:$0xff]
    %v93 = vld [vmem:[#allocation8 + $0x30] sm:$0xff]
    %v94 = vld [vmem:[#allocation8 + $0x38] sm:$0xff]
    %v95 = vld [vmem:[#allocation11] sm:$0xff]
    %v96 = vld [vmem:[#allocation11 + $0x8] sm:$0xff]
    %v97 = vld [vmem:[#allocation11 + $0x10] sm:$0xff]
    %v98 = vld [vmem:[#allocation11 + $0x18] sm:$0xff]
    %v99 = vld [vmem:[#allocation11 + $0x20] sm:$0x7]
    %vm100 = vcmask 285696
    %v102 = vsel %vm100, %v87, 0
    %v105 = vsel %vm100, %v88, 0
    %v108 = vsel %vm100, %v89, 0
    %v111 = vsel %vm100, %v90, 0
    %v114 = vsel %vm100, %v91, 0
    %v117 = vsel %vm100, %v92, 0
    %v120 = vsel %vm100, %v93, 0
    %v123 = vsel %vm100, %v94, 0
    %vm125 = vcmask 1042432
    %v127 = vsel %vm125, %v99, 0
    %129 = vmatprep.subr.mxu0 0.0
    %130 = vmatpush1.msra.mxu0 0.0
    %131 = vmatprep.subr.mxu0 0.0
    %132 = vmatpush1.msra.mxu0 0.0
    %133 = vmatprep.subr.mxu0 0.0
    %134 = vmatpush1.msra.mxu0 0.0
    %135 = vmatprep.subr.mxu0 0.0
    %136 = vmatpush1.msra.mxu0 0.0
    %137 = vmatprep.subr.mxu0 0.0
    %138 = vmatpush1.msra.mxu0 0.0
    %139 = vmatprep.subr.mxu0 0.0
    %140 = vmatpush1.msra.mxu0 0.0
    %141 = vmatprep.subr.mxu0 0.0
    %142 = vmatpush1.msra.mxu0 0.0
    %143 = vmatprep.subr.mxu0 0.0
    %144 = vmatpush1.msra.mxu0 0.0
    %145 = vmatprep.subr.mxu0 0.0
    %146 = vmatpush1.msra.mxu0 0.0
    %147 = vmatprep.subr.mxu0 0.0
    %148 = vmatpush1.msra.mxu0 0.0
    %149 = vmatprep.subr.mxu0 0.0
    %150 = vmatpush1.msra.mxu0 0.0
    %151 = vmatprep.subr.mxu0 0.0
    %152 = vmatpush1.msra.mxu0 %v127
    %153 = vmatprep.subr.mxu0 0.0
    %154 = vmatpush1.msra.mxu0 %v98
    %155 = vmatprep.subr.mxu0 0.0
    %156 = vmatpush1.msra.mxu0 %v97
    %157 = vmatprep.subr.mxu0 0.0
    %158 = vmatpush1.msra.mxu0 %v96
    %159 = vmatprep.subr.mxu0 0.0
    %160 = vmatpush1.msra.mxu0 %v95
    %161 = vmatprep.subr.mxu0 0.0
    %162 = vmatpush2.msra.mxu0 0.0
    %163 = vmatprep.subr.mxu0 0.0
    %164 = vmatpush2.msra.mxu0 0.0
    %165 = vmatprep.subr.mxu0 0.0
    %166 = vmatpush2.msra.mxu0 0.0
    %167 = vmatprep.subr.mxu0 0.0
    %168 = vmatpush2.msra.mxu0 0.0
    %169 = vmatprep.subr.mxu0 0.0
    %170 = vmatpush2.msra.mxu0 0.0
    %171 = vmatprep.subr.mxu0 0.0
    %172 = vmatpush2.msra.mxu0 0.0
    %173 = vmatprep.subr.mxu0 0.0
    %174 = vmatpush2.msra.mxu0 0.0
    %175 = vmatprep.subr.mxu0 0.0
    %176 = vmatpush2.msra.mxu0 0.0
    %177 = vmatprep.subr.mxu0 0.0
    %178 = vmatpush2.msra.mxu0 0.0
    %179 = vmatprep.subr.mxu0 0.0
    %180 = vmatpush2.msra.mxu0 0.0
    %181 = vmatprep.subr.mxu0 0.0
    %182 = vmatpush2.msra.mxu0 0.0
    %183 = vmatprep.subr.mxu0 0.0
    %184 = vmatpush2.msra.mxu0 0.0
    %185 = vmatprep.subr.mxu0 0.0
    %186 = vmatpush2.msra.mxu0 0.0
    %187 = vmatprep.subr.mxu0 0.0
    %188 = vmatpush2.msra.mxu0 0.0
    %189 = vmatprep.subr.mxu0 0.0
    %190 = vmatpush2.msra.mxu0 0.0
    %191 = vmatprep.subr.mxu0 0.0
    %192 = vmatpush2.msra.mxu0 0.0
    %193 = vmatprep.mubr.f32.mxu0 0.0
    %194 = vmatmul.mubr.f32.gmra.mxu0 %v102
    %v195 = vpop.f32.mrf.mxu0
    %v196 = vadd.f32 0.0, %v195
    %v197 = vpop.f32.mrf.mxu0
    %198 = vmatprep.mubr.f32.mxu0 0.0
    %199 = vmatmul.mubr.f32.gmra.mxu0 %v105
    %v200 = vpop.f32.mrf.mxu0
    %v201 = vadd.f32 0.0, %v200
    %v202 = vpop.f32.mrf.mxu0
    %203 = vmatprep.mubr.f32.mxu0 0.0
    %204 = vmatmul.mubr.f32.gmra.mxu0 %v108
    %v205 = vpop.f32.mrf.mxu0
    %v206 = vadd.f32 0.0, %v205
    %v207 = vpop.f32.mrf.mxu0
    %208 = vmatprep.mubr.f32.mxu0 0.0
    %209 = vmatmul.mubr.f32.gmra.mxu0 %v111
    %v210 = vpop.f32.mrf.mxu0
    %v211 = vadd.f32 0.0, %v210
    %v212 = vpop.f32.mrf.mxu0
    %213 = vmatprep.mubr.f32.mxu0 0.0
    %214 = vmatmul.mubr.f32.gmra.mxu0 %v114
    %v215 = vpop.f32.mrf.mxu0
    %v216 = vadd.f32 0.0, %v215
    %v217 = vpop.f32.mrf.mxu0
    %218 = vmatprep.mubr.f32.mxu0 0.0
    %219 = vmatmul.mubr.f32.gmra.mxu0 %v117
    %v220 = vpop.f32.mrf.mxu0
    %v221 = vadd.f32 0.0, %v220
    %v222 = vpop.f32.mrf.mxu0
    %223 = vmatprep.mubr.f32.mxu0 0.0
    %224 = vmatmul.mubr.f32.gmra.mxu0 %v120
    %v225 = vpop.f32.mrf.mxu0
    %v226 = vadd.f32 0.0, %v225
    %v227 = vpop.f32.mrf.mxu0
    %228 = vmatprep.mubr.f32.mxu0 0.0
    %229 = vmatmul.mubr.f32.gmra.mxu0 %v123
    %v230 = vpop.f32.mrf.mxu0
    %v231 = vadd.f32 0.0, %v230
    %v232 = vpop.f32.mrf.mxu0
    %233 = vdwg.mxu0
    %v234 = vld [vmem:[#allocation5] sm:$0xff]
    %v235 = vld [vmem:[#allocation10] sm:$0xff]
    %v236 = vld [vmem:[#allocation10 + $0x8] sm:$0xff]
    %vm237 = vcmask 130048
    %v239 = vsel %vm237, %v234, 0
    %241 = vmatprep.subr.mxu0 0.0
    %242 = vmatpush1.msra.mxu0 0.0
    %243 = vmatprep.subr.mxu0 0.0
    %244 = vmatpush1.msra.mxu0 0.0
    %245 = vmatprep.subr.mxu0 0.0
    %246 = vmatpush1.msra.mxu0 0.0
    %247 = vmatprep.subr.mxu0 0.0
    %248 = vmatpush1.msra.mxu0 0.0
    %249 = vmatprep.subr.mxu0 0.0
    %250 = vmatpush1.msra.mxu0 0.0
    %251 = vmatprep.subr.mxu0 0.0
    %252 = vmatpush1.msra.mxu0 0.0
    %253 = vmatprep.subr.mxu0 0.0
    %254 = vmatpush1.msra.mxu0 0.0
    %255 = vmatprep.subr.mxu0 0.0
    %256 = vmatpush1.msra.mxu0 0.0
    %257 = vmatprep.subr.mxu0 0.0
    %258 = vmatpush1.msra.mxu0 0.0
    %259 = vmatprep.subr.mxu0 0.0
    %260 = vmatpush1.msra.mxu0 0.0
    %261 = vmatprep.subr.mxu0 0.0
    %262 = vmatpush1.msra.mxu0 0.0
    %263 = vmatprep.subr.mxu0 0.0
    %264 = vmatpush1.msra.mxu0 0.0
    %265 = vmatprep.subr.mxu0 0.0
    %266 = vmatpush1.msra.mxu0 0.0
    %267 = vmatprep.subr.mxu0 0.0
    %268 = vmatpush1.msra.mxu0 0.0
    %269 = vmatprep.subr.mxu0 0.0
    %270 = vmatpush1.msra.mxu0 %v236
    %271 = vmatprep.subr.mxu0 0.0
    %272 = vmatpush1.msra.mxu0 %v235
    %273 = vmatprep.subr.mxu0 0.0
    %274 = vmatpush2.msra.mxu0 0.0
    %275 = vmatprep.subr.mxu0 0.0
    %276 = vmatpush2.msra.mxu0 0.0
    %277 = vmatprep.subr.mxu0 0.0
    %278 = vmatpush2.msra.mxu0 0.0
    %279 = vmatprep.subr.mxu0 0.0
    %280 = vmatpush2.msra.mxu0 0.0
    %281 = vmatprep.subr.mxu0 0.0
    %282 = vmatpush2.msra.mxu0 0.0
    %283 = vmatprep.subr.mxu0 0.0
    %284 = vmatpush2.msra.mxu0 0.0
    %285 = vmatprep.subr.mxu0 0.0
    %286 = vmatpush2.msra.mxu0 0.0
    %287 = vmatprep.subr.mxu0 0.0
    %288 = vmatpush2.msra.mxu0 0.0
    %289 = vmatprep.subr.mxu0 0.0
    %290 = vmatpush2.msra.mxu0 0.0
    %291 = vmatprep.subr.mxu0 0.0
    %292 = vmatpush2.msra.mxu0 0.0
    %293 = vmatprep.subr.mxu0 0.0
    %294 = vmatpush2.msra.mxu0 0.0
    %295 = vmatprep.subr.mxu0 0.0
    %296 = vmatpush2.msra.mxu0 0.0
    %297 = vmatprep.subr.mxu0 0.0
    %298 = vmatpush2.msra.mxu0 0.0
    %299 = vmatprep.subr.mxu0 0.0
    %300 = vmatpush2.msra.mxu0 0.0
    %301 = vmatprep.subr.mxu0 0.0
    %302 = vmatpush2.msra.mxu0 0.0
    %303 = vmatprep.subr.mxu0 0.0
    %304 = vmatpush2.msra.mxu0 0.0
    %305 = vmatprep.mubr.f32.mxu0 0.0
    %306 = vmatmul.mubr.f32.gmra.mxu0 %v239
    %v307 = vpop.f32.mrf.mxu0
    %v308 = vadd.f32 0.0, %v307
    %v309 = vpop.f32.mrf.mxu0
    %310 = vdwg.mxu0
    %v312 = vcombine.high %v308, %v308
    %v314 = vunpack.c.l.s4 1966171168
    %v315 = vunpack.c.0.s8 %v314
    %v316 = vlaneseq
    %v317 = vshrl.u32 %v316, 7
    %v318 = vsub.s32 %v315, %v317
    %v319 = vrot.slane %v308, %v318
    %v321 = vunpack.c.l.s4 1966171168
    %v322 = vunpack.c.0.s8 %v321
    %v323 = vlaneseq
    %v324 = vshrl.u32 %v323, 7
    %v325 = vsub.s32 %v322, %v324
    %v326 = vrot.slane %v312, %v325
    %v327 = vcombine.high %v319, %v319
    %v328 = vcombine.high %v326, %v326
    %v330 = vunpack.c.l.s4 1966171168
    %v331 = vunpack.c.0.s8 %v330
    %v332 = vlaneseq
    %v333 = vshrl.u32 %v332, 7
    %v334 = vsub.s32 %v331, %v333
    %v335 = vrot.slane %v319, %v334
    %v337 = vunpack.c.l.s4 1966171168
    %v338 = vunpack.c.0.s8 %v337
    %v339 = vlaneseq
    %v340 = vshrl.u32 %v339, 7
    %v341 = vsub.s32 %v338, %v340
    %v342 = vrot.slane %v326, %v341
    %v344 = vunpack.c.l.s4 1966171168
    %v345 = vunpack.c.0.s8 %v344
    %v346 = vlaneseq
    %v347 = vshrl.u32 %v346, 7
    %v348 = vsub.s32 %v345, %v347
    %v349 = vrot.slane %v327, %v348
    %v351 = vunpack.c.l.s4 1966171168
    %v352 = vunpack.c.0.s8 %v351
    %v353 = vlaneseq
    %v354 = vshrl.u32 %v353, 7
    %v355 = vsub.s32 %v352, %v354
    %v356 = vrot.slane %v328, %v355
    %v357 = vcombine.high %v335, %v335
    %v358 = vcombine.high %v342, %v342
    %v359 = vcombine.high %v349, %v349
    %v360 = vcombine.high %v356, %v356
    %v361 = vlaneseq
    %v362 = vshrl.u32 %v361, 7
    %v363 = vsub.s32 0, %v362
    %v364 = vrot.slane %v335, %v363
    %v365 = vlaneseq
    %v366 = vshrl.u32 %v365, 7
    %v367 = vsub.s32 0, %v366
    %v368 = vrot.slane %v349, %v367
    %v369 = vlaneseq
    %v370 = vshrl.u32 %v369, 7
    %v371 = vsub.s32 0, %v370
    %v372 = vrot.slane %v357, %v371
    %v373 = vlaneseq
    %v374 = vshrl.u32 %v373, 7
    %v375 = vsub.s32 0, %v374
    %v376 = vrot.slane %v359, %v375
    %v377 = vlaneseq
    %v378 = vshrl.u32 %v377, 7
    %v379 = vsub.s32 0, %v378
    %v380 = vrot.slane %v342, %v379
    %v381 = vlaneseq
    %v382 = vshrl.u32 %v381, 7
    %v383 = vsub.s32 0, %v382
    %v384 = vrot.slane %v356, %v383
    %v385 = vlaneseq
    %v386 = vshrl.u32 %v385, 7
    %v387 = vsub.s32 0, %v386
    %v388 = vrot.slane %v358, %v387
    %v389 = vlaneseq
    %v390 = vshrl.u32 %v389, 7
    %v391 = vsub.s32 0, %v390
    %v392 = vrot.slane %v360, %v391
    %v401 = vadd.f32 %v196, %v364
    %v402 = vadd.f32 %v201, %v368
    %v403 = vadd.f32 %v206, %v372
    %v404 = vadd.f32 %v211, %v376
    %v405 = vadd.f32 %v216, %v380
    %v406 = vadd.f32 %v221, %v384
    %v407 = vadd.f32 %v226, %v388
    %v408 = vadd.f32 %v231, %v392
    %v409 = vlaneseq
    %v410 = vshrl.u32 %v409, 7
    %v411 = vsub.s32 0, %v410
    %v412 = vrot.slane %v86, %v411
    %v413 = vadd.f32 %v401, %v412
    %v414 = vadd.f32 %v402, %v412
    %v415 = vadd.f32 %v403, %v412
    %v416 = vadd.f32 %v404, %v412
    %v417 = vadd.f32 %v405, %v412
    %v418 = vadd.f32 %v406, %v412
    %v419 = vadd.f32 %v407, %v412
    %v420 = vadd.f32 %v408, %v412
    %v421 = vtanh.pop %v413
    %v422 = vtanh.pop %v414
    %v423 = vtanh.pop %v415
    %v424 = vtanh.pop %v416
    %v425 = vtanh.pop %v417
    %v426 = vtanh.pop %v418
    %v427 = vtanh.pop %v419
    %v428 = vtanh.pop %v420
    %v429 = vlaneseq
    %v430 = vshrl.u32 %v429, 7
    %v431 = vsub.s32 1, %v430
    %v432 = vrot.slane %v86, %v431
    %v433 = vmul.f32 %v421, %v432
    %v434 = vmul.f32 %v422, %v432
    %v435 = vmul.f32 %v423, %v432
    %v436 = vmul.f32 %v424, %v432
    %v437 = vmul.f32 %v425, %v432
    %v438 = vmul.f32 %v426, %v432
    %v439 = vmul.f32 %v427, %v432
    %v440 = vmul.f32 %v428, %v432
    %441 = vadd.xlane.f32.xlu0 %v433
    %v442 = vpop.xlane.xlu0 %441
    %443 = vadd.xlane.f32.xlu0 %v434
    %v444 = vpop.xlane.xlu0 %443
    %445 = vadd.xlane.f32.xlu0 %v435
    %v446 = vpop.xlane.xlu0 %445
    %447 = vadd.xlane.f32.xlu0 %v436
    %v448 = vpop.xlane.xlu0 %447
    %449 = vadd.xlane.f32.xlu0 %v437
    %v450 = vpop.xlane.xlu0 %449
    %451 = vadd.xlane.f32.xlu0 %v438
    %v452 = vpop.xlane.xlu0 %451
    %453 = vadd.xlane.f32.xlu0 %v439
    %v454 = vpop.xlane.xlu0 %453
    %455 = vadd.xlane.f32.xlu0 %v440
    %v456 = vpop.xlane.xlu0 %455
    %v465 = vlaneseq
    %v466 = vand.u32 %v465, 127
    %v467 = vlaneseq
    %v468 = vshrl.u32 %v467, 7
    %v469 = vsub.s32 %v466, %v468
    %v470 = vrot.slane %v442, %v469
    %v471 = vlaneseq
    %v472 = vshrl.u32 %v471, 7
    %v473 = vsub.s32 %v466, %v472
    %v474 = vrot.slane %v444, %v473
    %v475 = vlaneseq
    %v476 = vshrl.u32 %v475, 7
    %v477 = vsub.s32 %v466, %v476
    %v478 = vrot.slane %v446, %v477
    %v479 = vlaneseq
    %v480 = vshrl.u32 %v479, 7
    %v481 = vsub.s32 %v466, %v480
    %v482 = vrot.slane %v448, %v481
    %v483 = vlaneseq
    %v484 = vshrl.u32 %v483, 7
    %v485 = vsub.s32 %v466, %v484
    %v486 = vrot.slane %v450, %v485
    %v487 = vlaneseq
    %v488 = vshrl.u32 %v487, 7
    %v489 = vsub.s32 %v466, %v488
    %v490 = vrot.slane %v452, %v489
    %v491 = vlaneseq
    %v492 = vshrl.u32 %v491, 7
    %v493 = vsub.s32 %v466, %v492
    %v494 = vrot.slane %v454, %v493
    %v495 = vlaneseq
    %v496 = vshrl.u32 %v495, 7
    %v497 = vsub.s32 %v466, %v496
    %v498 = vrot.slane %v456, %v497
    %vm499 = vcmask 1041409
    %v500 = vsel %vm499, %v474, %v470
    %vm501 = vcmask 1042434
    %v502 = vsel %vm501, %v478, %v500
    %vm503 = vcmask 1043459
    %v504 = vsel %vm503, %v482, %v502
    %vm505 = vcmask 1044484
    %v506 = vsel %vm505, %v486, %v504
    %vm507 = vcmask 1045509
    %v508 = vsel %vm507, %v490, %v506
    %vm509 = vcmask 1046534
    %v510 = vsel %vm509, %v494, %v508
    %vm511 = vcmask 1047559
    %v512 = vsel %vm511, %v498, %v510
    %vm514 = vcmask 64512
    %515 = vst.msk [vmem:[#allocation14] sm:$0xff] %vm514, %v512
    %v516 = vld [vmem:[#allocation2] sm:$0xff]
    %v517 = vsel %vm514, %v512, -inf
    %518 = vmax.xlane.f32.xlu0 %v517
    %v519 = vpop.xlane.xlu0 %518
    %v520 = vmax.f32 %v516, %v519
    %v521 = vsub.f32 %v516, %v520
    %v522 = vmul.f32 %v521, 1.442695
    %v523 = vpow.pop %v522
    %525 = vset.pattern.permute.xlu0 0
    %526 = vperm.xlu0 %525, %v520
    %v527 = vpop.permute.xlu0 %526
    %v528 = vlaneseq
    %v529 = vshrl.u32 %v528, 7
    %v530 = vsub.s32 0, %v529
    %v531 = vrot.slane %v527, %v530
    %v532 = vlaneseq
    %v533 = vshrl.u32 %v532, 7
    %v534 = vsub.s32 1, %v533
    %v535 = vrot.slane %v527, %v534
    %v536 = vlaneseq
    %v537 = vshrl.u32 %v536, 7
    %v538 = vsub.s32 2, %v537
    %v539 = vrot.slane %v527, %v538
    %v540 = vlaneseq
    %v541 = vshrl.u32 %v540, 7
    %v542 = vsub.s32 3, %v541
    %v543 = vrot.slane %v527, %v542
    %v544 = vlaneseq
    %v545 = vshrl.u32 %v544, 7
    %v546 = vsub.s32 4, %v545
    %v547 = vrot.slane %v527, %v546
    %v548 = vlaneseq
    %v549 = vshrl.u32 %v548, 7
    %v550 = vsub.s32 5, %v549
    %v551 = vrot.slane %v527, %v550
    %v552 = vlaneseq
    %v553 = vshrl.u32 %v552, 7
    %v554 = vsub.s32 6, %v553
    %v555 = vrot.slane %v527, %v554
    %v556 = vlaneseq
    %v557 = vshrl.u32 %v556, 7
    %v558 = vsub.s32 7, %v557
    %v559 = vrot.slane %v527, %v558
    %v568 = vsub.f32 %v442, %v531
    %v569 = vsub.f32 %v444, %v535
    %v570 = vsub.f32 %v446, %v539
    %v571 = vsub.f32 %v448, %v543
    %v572 = vsub.f32 %v450, %v547
    %v573 = vsub.f32 %v452, %v551
    %v574 = vsub.f32 %v454, %v555
    %v575 = vsub.f32 %v456, %v559
    %v576 = vmul.f32 %v568, 1.442695
    %v577 = vpow.pop %v576
    %v578 = vmul.f32 %v569, 1.442695
    %v579 = vpow.pop %v578
    %v580 = vmul.f32 %v570, 1.442695
    %v581 = vpow.pop %v580
    %v582 = vmul.f32 %v571, 1.442695
    %v583 = vpow.pop %v582
    %v584 = vmul.f32 %v572, 1.442695
    %v585 = vpow.pop %v584
    %v586 = vmul.f32 %v573, 1.442695
    %v587 = vpow.pop %v586
    %v588 = vmul.f32 %v574, 1.442695
    %v589 = vpow.pop %v588
    %v590 = vmul.f32 %v575, 1.442695
    %v591 = vpow.pop %v590
    %v592 = vld [vmem:[#allocation3] sm:$0xff]
    %v593 = vmul.f32 %v523, %v592
    %602 = vset.pattern.permute.xlu0 0
    %603 = vperm.xlu0 %602, %v577
    %v604 = vpop.permute.xlu0 %603
    %605 = vset.pattern.permute.xlu0 0
    %606 = vperm.xlu0 %605, %v579
    %v607 = vpop.permute.xlu0 %606
    %608 = vset.pattern.permute.xlu0 0
    %609 = vperm.xlu0 %608, %v581
    %v610 = vpop.permute.xlu0 %609
    %611 = vset.pattern.permute.xlu0 0
    %612 = vperm.xlu0 %611, %v583
    %v613 = vpop.permute.xlu0 %612
    %614 = vset.pattern.permute.xlu0 0
    %615 = vperm.xlu0 %614, %v585
    %v616 = vpop.permute.xlu0 %615
    %617 = vset.pattern.permute.xlu0 0
    %618 = vperm.xlu0 %617, %v587
    %v619 = vpop.permute.xlu0 %618
    %620 = vset.pattern.permute.xlu0 0
    %621 = vperm.xlu0 %620, %v589
    %v622 = vpop.permute.xlu0 %621
    %623 = vset.pattern.permute.xlu0 0
    %624 = vperm.xlu0 %623, %v591
    %v625 = vpop.permute.xlu0 %624
    %v626 = vlaneseq
    %v627 = vshrl.u32 %v626, 7
    %v628 = vsub.s32 %v466, %v627
    %v629 = vrot.slane %v604, %v628
    %v630 = vlaneseq
    %v631 = vshrl.u32 %v630, 7
    %v632 = vsub.s32 %v466, %v631
    %v633 = vrot.slane %v607, %v632
    %v634 = vlaneseq
    %v635 = vshrl.u32 %v634, 7
    %v636 = vsub.s32 %v466, %v635
    %v637 = vrot.slane %v610, %v636
    %v638 = vlaneseq
    %v639 = vshrl.u32 %v638, 7
    %v640 = vsub.s32 %v466, %v639
    %v641 = vrot.slane %v613, %v640
    %v642 = vlaneseq
    %v643 = vshrl.u32 %v642, 7
    %v644 = vsub.s32 %v466, %v643
    %v645 = vrot.slane %v616, %v644
    %v646 = vlaneseq
    %v647 = vshrl.u32 %v646, 7
    %v648 = vsub.s32 %v466, %v647
    %v649 = vrot.slane %v619, %v648
    %v650 = vlaneseq
    %v651 = vshrl.u32 %v650, 7
    %v652 = vsub.s32 %v466, %v651
    %v653 = vrot.slane %v622, %v652
    %v654 = vlaneseq
    %v655 = vshrl.u32 %v654, 7
    %v656 = vsub.s32 %v466, %v655
    %v657 = vrot.slane %v625, %v656
    %v658 = vsel %vm499, %v633, %v629
    %v659 = vsel %vm501, %v637, %v658
    %v660 = vsel %vm503, %v641, %v659
    %v661 = vsel %vm505, %v645, %v660
    %v662 = vsel %vm507, %v649, %v661
    %v663 = vsel %vm509, %v653, %v662
    %v664 = vsel %vm511, %v657, %v663
    %v666 = vsel %vm514, %v664, 0.0
    %667 = vadd.xlane.f32.xlu0 %v666
    %v668 = vpop.xlane.xlu0 %667
    %v669 = vadd.f32 %v593, %v668
    %vm670 = vcmask 7168
    %671 = vst.msk [vmem:[#allocation3] sm:$0xff] %vm670, %v669
    %v672 = vld [vmem:[#allocation4] sm:$0xff]
    %674 = vset.pattern.permute.xlu0 0
    %675 = vperm.xlu0 %674, %v523
    %v676 = vpop.permute.xlu0 %675
    %v678 = vmul.f32 %v676, %v672
    %v687 = vmul.f32 %v604, %v87
    %v688 = vmul.f32 %v607, %v88
    %v689 = vmul.f32 %v610, %v89
    %v690 = vmul.f32 %v613, %v90
    %v691 = vmul.f32 %v616, %v91
    %v692 = vmul.f32 %v619, %v92
    %v693 = vmul.f32 %v622, %v93
    %v694 = vmul.f32 %v625, %v94
    %vm695 = vcmask 261120
    %v696 = vsel %vm695, %v687, 0.0
    %v697 = vrot.slane %v696, 4
    %v698 = vadd.f32 %v696, %v697
    %v699 = vrot.slane %v698, 2
    %v700 = vadd.f32 %v698, %v699
    %v701 = vrot.slane %v700, 1
    %v702 = vadd.f32 %v700, %v701
    %v703 = vsel %vm695, %v688, 0.0
    %v704 = vrot.slane %v703, 4
    %v705 = vadd.f32 %v703, %v704
    %v706 = vrot.slane %v705, 2
    %v707 = vadd.f32 %v705, %v706
    %v708 = vrot.slane %v707, 1
    %v709 = vadd.f32 %v707, %v708
    %v710 = vsel %vm695, %v689, 0.0
    %v711 = vrot.slane %v710, 4
    %v712 = vadd.f32 %v710, %v711
    %v713 = vrot.slane %v712, 2
    %v714 = vadd.f32 %v712, %v713
    %v715 = vrot.slane %v714, 1
    %v716 = vadd.f32 %v714, %v715
    %v717 = vsel %vm695, %v690, 0.0
    %v718 = vrot.slane %v717, 4
    %v719 = vadd.f32 %v717, %v718
    %v720 = vrot.slane %v719, 2
    %v721 = vadd.f32 %v719, %v720
    %v722 = vrot.slane %v721, 1
    %v723 = vadd.f32 %v721, %v722
    %v724 = vsel %vm695, %v691, 0.0
    %v725 = vrot.slane %v724, 4
    %v726 = vadd.f32 %v724, %v725
    %v727 = vrot.slane %v726, 2
    %v728 = vadd.f32 %v726, %v727
    %v729 = vrot.slane %v728, 1
    %v730 = vadd.f32 %v728, %v729
    %v731 = vsel %vm695, %v692, 0.0
    %v732 = vrot.slane %v731, 4
    %v733 = vadd.f32 %v731, %v732
    %v734 = vrot.slane %v733, 2
    %v735 = vadd.f32 %v733, %v734
    %v736 = vrot.slane %v735, 1
    %v737 = vadd.f32 %v735, %v736
    %v738 = vsel %vm695, %v693, 0.0
    %v739 = vrot.slane %v738, 4
    %v740 = vadd.f32 %v738, %v739
    %v741 = vrot.slane %v740, 2
    %v742 = vadd.f32 %v740, %v741
    %v743 = vrot.slane %v742, 1
    %v744 = vadd.f32 %v742, %v743
    %v745 = vsel %vm695, %v694, 0.0
    %v746 = vrot.slane %v745, 4
    %v747 = vadd.f32 %v745, %v746
    %v748 = vrot.slane %v747, 2
    %v749 = vadd.f32 %v747, %v748
    %v750 = vrot.slane %v749, 1
    %v751 = vadd.f32 %v749, %v750
    %v760 = vsel %vm499, %v709, %v702
    %v761 = vsel %vm501, %v716, %v760
    %v762 = vsel %vm503, %v723, %v761
    %v763 = vsel %vm505, %v730, %v762
    %v764 = vsel %vm507, %v737, %v763
    %v765 = vsel %vm509, %v744, %v764
    %v766 = vsel %vm511, %v751, %v765
    %v768 = vadd.f32 %v678, %v766
    %769 = vst.msk [vmem:[#allocation4] sm:$0xff] %vm695, %v768
    %770 = vst.msk [vmem:[#allocation2] sm:$0xff] %vm670, %v520
    // Predicated region
    $region42: #{tpu_custom_call.1} parent=1 // pred_check
      %p771 = pneg %p77
    $region43: #{tpu_custom_call.1} parent=1 // pred_check_branch
      %773 = sbr.rel (%p771) target = $region45
    $region44: #{tpu_custom_call.1} parent=1 // pred_region
      %v774 = vld [vmem:[#allocation3] sm:$0xff]
      %v775 = vrcp.pop %v774
      %v776 = vmul.f32 %v774, %v775
      %v777 = vsub.f32 2.0, %v776
      %v778 = vmul.f32 %v775, %v777
      %v779 = vld [vmem:[#allocation4] sm:$0xff]
      %781 = vset.pattern.permute.xlu0 0
      %782 = vperm.xlu0 %781, %v778
      %v783 = vpop.permute.xlu0 %782
      %v785 = vmul.f32 %v779, %v783
      %786 = vst.msk [vmem:[#allocation13] sm:$0xff] %vm695, %v785
    $region45: #{tpu_custom_call.1} parent=1 // pred_fallthru
      _
    // Predicated region
    $region46: #{tpu_custom_call.1} parent=1 // pred_check
      _
    $region47: #{tpu_custom_call.1} parent=1 // pred_check_branch
      %788 = sbr.rel (0) target = $region49
    $region48: #{tpu_custom_call.1} parent=1 // pred_region
      %s790 = ssub.s32 128, 128
      %791 = vsyncadd [#allocation7], %s790
      %s793 = sshll.u32 [#allocation13], 4
      %s794 = int_to_ptr.vmem [resolvable:$true] %s793
      %796 = dma.vmem_to_hbm [thread:$0]  %s794, 128, %s5, [#allocation7]
    $region49: #{tpu_custom_call.1} parent=1 // pred_fallthru
      _
    // Predicated region
    $region50: #{tpu_custom_call.1} parent=1 // pred_check
      _
    $region51: #{tpu_custom_call.1} parent=1 // pred_check_branch
      %798 = sbr.rel (0) target = $region53
    $region52: #{tpu_custom_call.1} parent=1 // pred_region
      %s800 = ssub.s32 128, 128
      %801 = vsyncadd [#allocation15], %s800
      %s803 = sshll.u32 [#allocation14], 4
      %s804 = int_to_ptr.vmem [resolvable:$true] %s803
      %806 = dma.vmem_to_hbm [thread:$0]  %s804, 128, %s6, [#allocation15]
    $region53: #{tpu_custom_call.1} parent=1 // pred_fallthru
      _
    // Predicated region
    $region54: #{tpu_custom_call.1} parent=1 // pred_check
      _
    $region55: #{tpu_custom_call.1} parent=1 // pred_check_branch
      %808 = sbr.rel (0) target = $region57
    $region56: #{tpu_custom_call.1} parent=1 // pred_region
      %809 = dma.done [#allocation7], 128
    $region57: #{tpu_custom_call.1} parent=1 // pred_fallthru
      _
    // Predicated region
    $region58: #{tpu_custom_call.1} parent=1 // pred_check
      _
    $region59: #{tpu_custom_call.1} parent=1 // pred_check_branch
      %811 = sbr.rel (0) target = $region61
    $region60: #{tpu_custom_call.1} parent=1 // pred_region
      %812 = dma.done [#allocation15], 128
    $region61: #{tpu_custom_call.1} parent=1 // pred_fallthru
      _
    %813 = vsyncpa [#allocation6], 1
    %814 = vsyncpa [#allocation9], 1
    %815 = vsyncpa [#allocation12], 1
    %816 = vsyncpa [#allocation7], 1
    %817 = vsyncpa [#allocation15], 1

</llo_original>
